<compile_context>
chip_gen: v7x
topology: tpu7x:2x2x1
jax: 0.10.0
libtpu: 0.0.40
codegen_flags: <defaults>
</compile_context>

<pallas_src>
import jax
import jax.numpy as jnp
from jax.experimental import pallas as pl
from jax.experimental.pallas import tpu as pltpu


def _normalization_kernel(scale_ref, bias_ref, img_ref, out_ref):
    # scale_ref / bias_ref : VMEM (RB, 1) f32, broadcast along lanes
    # img_ref / out_ref    : VMEM (RB, LB) blocks of the flattened image
    x = img_ref[...].astype(jnp.float32)
    out_ref[...] = (x * scale_ref[...] + bias_ref[...]).astype(out_ref.dtype)


def _sublane_pack(in_itemsize, out_itemsize):
    """Native sublane packing (rows per 32-bit sublane word) for the narrower dtype."""
    return max(8, 32 // min(in_itemsize, out_itemsize))


def _pick_row_split(R, L):
    """If N*C is tiny, split each row into S sub-rows so the sublane dim >= 8.

    Requires L % S == 0 and (L // S) % 128 == 0 so blocks stay lane-dense.
    Returns S >= 1 (S == 1 means no split).
    """
    if R >= 8:
        return 1
    s_min = -(-8 // R)  # ceil(8 / R)
    for S in range(s_min, 65):
        if L % S == 0 and (L // S) % 128 == 0 and (L // S) >= 128:
            return S
    return 1


def _pick_blocks(R, L, in_itemsize, out_itemsize):
    """Choose lane-dense, evenly-dividing block sizes targeting ~4 MiB blocks."""
    LANE_TARGET = 32768           # elements; multiple of 128
    BLOCK_BYTES_TARGET = 4 << 20  # ~4 MiB for the larger of the in/out block
    max_item = max(in_itemsize, out_itemsize)
    pack = _sublane_pack(in_itemsize, out_itemsize)

    # Grow the lane target when R is small and the full row-extent block would
    # otherwise sit far below the byte target (small-batch inference).
    lane_target = LANE_TARGET
    if R * LANE_TARGET * max_item < BLOCK_BYTES_TARGET:
        lane_target = max(128, ((BLOCK_BYTES_TARGET // (R * max_item)) // 128) * 128)

    # LB: full extent if it fits, else the largest multiple-of-128 divisor of L.
    if L <= lane_target:
        LB = L
    else:
        LB = 0
        for cand in range((lane_target // 128) * 128, 0, -128):
            if L % cand == 0:
                LB = cand
                break
        if LB == 0:
            LB = (lane_target // 128) * 128  # ragged tail fallback (masked)

    # RB: as many rows as fit the byte target, rounded to the sublane packing,
    # preferring an exact divisor of R.
    bytes_per_row = LB * max_item
    rows_target = max(1, BLOCK_BYTES_TARGET // bytes_per_row)
    if rows_target >= R:
        RB = R  # full extent
    else:
        base = max(pack, (rows_target // pack) * pack)
        RB = min(base, R)
        cand = min(base, R)
        while cand >= pack:
            if R % cand == 0:
                RB = cand
                break
            cand -= pack
    return RB, LB


def _build_call(R, L, out_dtype, RB, LB, grid, cost, vmem_limit, use_buffered):
    stream_kwargs = {}
    if use_buffered:
        stream_kwargs = dict(pipeline_mode=pl.Buffered(3))
    return pl.pallas_call(
        _normalization_kernel,
        out_shape=jax.ShapeDtypeStruct((R, L), out_dtype),
        grid=grid,
        in_specs=[
            pl.BlockSpec((RB, 1), lambda i, j: (i, 0)),                    # scale (R,1)
            pl.BlockSpec((RB, 1), lambda i, j: (i, 0)),                    # bias  (R,1)
            pl.BlockSpec((RB, LB), lambda i, j: (i, j), **stream_kwargs),  # img
        ],
        out_specs=pl.BlockSpec((RB, LB), lambda i, j: (i, j), **stream_kwargs),
        compiler_params=pltpu.CompilerParams(
            dimension_semantics=("parallel", "parallel"),
            vmem_limit_bytes=vmem_limit,
        ),
        cost_estimate=cost,
    )


def normalization(img, mean, std, out_dtype=None):
    """Pallas equivalent of Normalization.forward. img: (N, C, H, W) NCHW.

    out_dtype: None -> keep floating input dtype; integer inputs emit bf16
    (request jnp.float32 explicitly for exact torch-style promotion).
    """
    N, C, H, W = img.shape
    if out_dtype is None:
        out_dtype = img.dtype if jnp.issubdtype(img.dtype, jnp.floating) else jnp.bfloat16
    out_dtype = jnp.dtype(out_dtype)

    # Precompute reciprocal / bias in f32 (size C; negligible).
    mean_f32 = jnp.asarray(mean, jnp.float32).reshape(C)
    std_f32 = jnp.asarray(std, jnp.float32).reshape(C)
    inv_std = 1.0 / std_f32
    bias = -mean_f32 * inv_std

    R, L = N * C, H * W
    # Small N*C: split rows so the sublane dim is >= 8 and blocks are full.
    S = _pick_row_split(R, L)
    R2, L2 = R * S, L // S

    x2d = img.reshape(R2, L2)                          # lane-dense flattened view
    scale_per_row = jnp.tile(inv_std, N)               # (R,)  channel = row % C
    bias_per_row = jnp.tile(bias, N)                   # (R,)
    if S > 1:
        scale_per_row = jnp.repeat(scale_per_row, S)   # (R*S,)
        bias_per_row = jnp.repeat(bias_per_row, S)
    scale_rows = scale_per_row.reshape(R2, 1)
    bias_rows = bias_per_row.reshape(R2, 1)

    in_itemsize = jnp.dtype(img.dtype).itemsize
    out_itemsize = out_dtype.itemsize
    RB, LB = _pick_blocks(R2, L2, in_itemsize, out_itemsize)
    grid = (pl.cdiv(R2, RB), pl.cdiv(L2, LB))

    # VMEM budget: triple-buffered img + out blocks plus headroom; stays well
    # under v7x's 64 MiB physical VMEM (v5e/v6e have 128 MiB physical).
    block_bytes = RB * LB * (in_itemsize + out_itemsize)
    vmem_limit = min(56 << 20, max(32 << 20, 3 * block_bytes + (4 << 20)))

    cost = pl.CostEstimate(
        flops=2 * img.size,
        transcendentals=0,
        bytes_accessed=img.size * in_itemsize + img.size * out_itemsize + 2 * R2 * 4,
    )

    try:
        call = _build_call(R2, L2, out_dtype, RB, LB, grid, cost, vmem_limit, True)
        out2d = call(scale_rows, bias_rows, x2d)
    except Exception:
        # Fallback: default double-buffered pipeline (correctness identical).
        call = _build_call(R2, L2, out_dtype, RB, LB, grid, cost, vmem_limit, False)
        out2d = call(scale_rows, bias_rows, x2d)

    return out2d.reshape(N, C, H, W)


if __name__ == "__main__":
    # Standard ImageNet-style per-channel stats (3 channels, matching
    # mean.view(-1, 1, 1) usage in the torch module).
    mean = jnp.array([0.485, 0.456, 0.406], dtype=jnp.float32)
    std = jnp.array([0.229, 0.224, 0.225], dtype=jnp.float32)

    key = jax.random.PRNGKey(0)
    img = jax.random.uniform(key, (2, 3, 16, 16), dtype=jnp.float32)  # NCHW

    out = normalization(img, mean, std)
    out = jax.block_until_ready(out)

    # Reference check against plain-JAX broadcasting semantics.
    ref = (img - mean.reshape(-1, 1, 1)) / std.reshape(-1, 1, 1)
    assert out.shape == img.shape and out.dtype == img.dtype
    assert jnp.allclose(out, ref, rtol=1e-5, atol=1e-6)

    # Integer-image path: uint8 input streams out as bf16 (byte-count win);
    # loose tolerance accounts for the bf16 output cast.
    img_u8 = jax.random.randint(jax.random.PRNGKey(1), (1, 3, 16, 16), 0, 256, jnp.uint8)
    out_u8 = jax.block_until_ready(normalization(img_u8, mean, std))
    ref_u8 = (img_u8.astype(jnp.float32) - mean.reshape(-1, 1, 1)) / std.reshape(-1, 1, 1)
    assert out_u8.dtype == jnp.bfloat16
    assert jnp.allclose(out_u8.astype(jnp.float32), ref_u8, rtol=2e-2, atol=1e-1)

    print("KERNEL_OK")
</pallas_src>

<mosaic_0001>
module attributes {stable_mosaic.version = 11 : i64} {
  func.func @_normalization_kernel(%arg0: i32, %arg1: i32, %arg2: memref<12x1xf32, #tpu.memory_space<vmem>>, %arg3: memref<12x1xf32, #tpu.memory_space<vmem>>, %arg4: memref<12x128xf32, #tpu.memory_space<vmem>>, %arg5: memref<12x128xf32, #tpu.memory_space<vmem>>) attributes {dimension_semantics = [#tpu.dimension_semantics<parallel>, #tpu.dimension_semantics<parallel>], iteration_bounds = array<i64: 1, 1>, scalar_prefetch = 0 : i64, scratch_operands = 0 : i64, tpu.core_type = #tpu.core_type<tc>, window_params = [{transform_indices = @transform_0, window_bounds = array<i64: 12, 1>}, {transform_indices = @transform_1, window_bounds = array<i64: 12, 1>}, {transform_indices = @transform_2, window_bounds = array<i64: 12, 128>}, {transform_indices = @transform_3, window_bounds = array<i64: 12, 128>}]} {
    %c0 = arith.constant 0 : index
    %c0_0 = arith.constant 0 : index
    %0 = vector.load %arg4[%c0, %c0_0] : memref<12x128xf32, #tpu.memory_space<vmem>>, vector<12x128xf32>
    %c0_1 = arith.constant 0 : index
    %c0_2 = arith.constant 0 : index
    %1 = vector.load %arg2[%c0_1, %c0_2] : memref<12x1xf32, #tpu.memory_space<vmem>>, vector<12x1xf32>
    %2 = vector.broadcast %1 : vector<12x1xf32> to vector<12x128xf32>
    %3 = arith.mulf %0, %2 : vector<12x128xf32>
    %c0_3 = arith.constant 0 : index
    %c0_4 = arith.constant 0 : index
    %4 = vector.load %arg3[%c0_3, %c0_4] : memref<12x1xf32, #tpu.memory_space<vmem>>, vector<12x1xf32>
    %5 = vector.broadcast %4 : vector<12x1xf32> to vector<12x128xf32>
    %6 = arith.addf %3, %5 : vector<12x128xf32>
    %c0_5 = arith.constant 0 : index
    %c0_6 = arith.constant 0 : index
    %7 = vector.load %arg5[%c0_5, %c0_6] : memref<12x128xf32, #tpu.memory_space<vmem>>, vector<12x128xf32>
    tpu.vector_store %arg5[%c0_5, %c0_6], %6 {strides = array<i32>} : memref<12x128xf32, #tpu.memory_space<vmem>>, vector<12x128xf32>,
    return
  }
  func.func @transform_0(%arg0: i32, %arg1: i32) -> (i32, i32) {
    %c0_i32 = arith.constant 0 : i32
    %c0_i32_0 = arith.constant 0 : i32
    return %arg0, %c0_i32 : i32, i32
  }
  func.func @transform_1(%arg0: i32, %arg1: i32) -> (i32, i32) {
    %c0_i32 = arith.constant 0 : i32
    %c0_i32_0 = arith.constant 0 : i32
    return %arg0, %c0_i32 : i32, i32
  }
  func.func @transform_2(%arg0: i32, %arg1: i32) -> (i32, i32) {
    %c0_i32 = arith.constant 0 : i32
    return %arg0, %arg1 : i32, i32
  }
  func.func @transform_3(%arg0: i32, %arg1: i32) -> (i32, i32) {
    %c0_i32 = arith.constant 0 : i32
    return %arg0, %arg1 : i32, i32
  }
}

</mosaic_0001>

<llo_original>
// kernel: tpu_custom_call.1
$region0: #{tpu_custom_call.1}
  #allocation0 [shape = 'u32[]', space=smem, size = 0x4, offset = 0x4, fixed_abs, tag = 'smem constant byte address 0x4 - core index']
  #allocation1 [shape = 'u32[144,128]{1,0:T(1,128)}', space=vmem, size = 0x12000, scoped, tag = 'internal scratch']
  %s0 = inlined_call_operand.vmem [shape: f32[12,1], index: 0, kind: input, shape index: {}]
  %s1 = inlined_call_operand.vmem [shape: f32[12,1], index: 1, kind: input, shape index: {}]
  %s2 = inlined_call_operand.vmem [shape: f32[12,128], index: 2, kind: input, shape index: {}]
  %s3 = inlined_call_operand.hbm [shape: f32[12,128], index: 3, kind: output, shape index: {}]
  %s4 = sld [smem:[#allocation0]]
  $region22: #{tpu_custom_call.1} parent=0
    _
  %s6 = ssub.s32 1, %s4
  %s7 = scalar_select 0, %s6, %s4
  $region1: #{tpu_custom_call.1} parent=0
    #allocation2 [shape = 'u8[8192]{0}', space=vmem, size = 0x2000, scoped, tag = 'output window, operand 0, single buffered']
    #allocation3 [shape = 's32[1]{0}', space=sflag, size = 0x4, scoped, tag = 'scoped memory for tpu_custom_call.1']
    %8 = vsyncpa [#allocation3], 0
    // Predicated region
    $region2: #{tpu_custom_call.1} parent=1 // pred_check
      _
    $region3: #{tpu_custom_call.1} parent=1 // pred_check_branch
      %10 = sbr.rel (0) target = $region5
    $region4: #{tpu_custom_call.1} parent=1 // pred_region
      _
    $region5: #{tpu_custom_call.1} parent=1 // pred_fallthru
      _
    // Predicated region
    $region6: #{tpu_custom_call.1} parent=1 // pred_check
      _
    $region7: #{tpu_custom_call.1} parent=1 // pred_check_branch
      %12 = sbr.rel (0) target = $region9
    $region8: #{tpu_custom_call.1} parent=1 // pred_region
      _
    $region9: #{tpu_custom_call.1} parent=1 // pred_fallthru
      _
    // Predicated region
    $region10: #{tpu_custom_call.1} parent=1 // pred_check
      _
    $region11: #{tpu_custom_call.1} parent=1 // pred_check_branch
      %14 = sbr.rel (0) target = $region13
    $region12: #{tpu_custom_call.1} parent=1 // pred_region
      _
    $region13: #{tpu_custom_call.1} parent=1 // pred_fallthru
      _
    %v15 = vld [vmem:[%s2] sm:$0xff]
    %v16 = vld [vmem:[%s2 + $0x8] sm:$0xf]
    %v17 = vld [vmem:[%s0] sm:$0xff]
    %v18 = vld [vmem:[%s0 + $0x8] sm:$0xf]
    %20 = vset.pattern.permute.xlu0 0
    %21 = vperm.xlu0 %20, %v17
    %v22 = vpop.permute.xlu0 %21
    %25 = vset.pattern.permute.xlu0 0
    %26 = vperm.xlu0 %25, %v18
    %v27 = vpop.permute.xlu0 %26
    %v29 = vmul.f32 %v15, %v22
    %v30 = vmul.f32 %v16, %v27
    %v31 = vld [vmem:[%s1] sm:$0xff]
    %v32 = vld [vmem:[%s1 + $0x8] sm:$0xf]
    %34 = vset.pattern.permute.xlu0 0
    %35 = vperm.xlu0 %34, %v31
    %v36 = vpop.permute.xlu0 %35
    %39 = vset.pattern.permute.xlu0 0
    %40 = vperm.xlu0 %39, %v32
    %v41 = vpop.permute.xlu0 %40
    %v43 = vadd.f32 %v29, %v36
    %v44 = vadd.f32 %v30, %v41
    %45 = vst [vmem:[#allocation2] sm:$0xff] %v43
    %46 = vst [vmem:[#allocation2 + $0x8] sm:$0xf] %v44
    // Predicated region
    $region14: #{tpu_custom_call.1} parent=1 // pred_check
      _
    $region15: #{tpu_custom_call.1} parent=1 // pred_check_branch
      %48 = sbr.rel (0) target = $region17
    $region16: #{tpu_custom_call.1} parent=1 // pred_region
      %s50 = ssub.s32 256, 256
      %51 = vsyncadd [#allocation3], %s50
      %s52 = sshll.u32 [#allocation2], 4
      %s53 = int_to_ptr.vmem [resolvable:$true] %s52
      %58 = dma.vmem_to_hbm [thread:$0]  %s53, 256, %s3, [#allocation3], 128, 128, 8
    $region17: #{tpu_custom_call.1} parent=1 // pred_fallthru
      _
    // Predicated region
    $region18: #{tpu_custom_call.1} parent=1 // pred_check
      _
    $region19: #{tpu_custom_call.1} parent=1 // pred_check_branch
      %60 = sbr.rel (0) target = $region21
    $region20: #{tpu_custom_call.1} parent=1 // pred_region
      %61 = dma.done [#allocation3], 256
    $region21: #{tpu_custom_call.1} parent=1 // pred_fallthru
      _
    %62 = vsyncpa [#allocation3], 1

</llo_original>
